<compile_context>
chip_gen: v7x
topology: tpu7x:2x2x1
jax: 0.10.0
libtpu: 0.0.40
codegen_flags: <defaults>
</compile_context>

<pallas_src>
import jax
import jax.numpy as jnp
from jax import lax
from jax.experimental import pallas as pl
from jax.experimental.pallas import tpu as pltpu

DELTA = 1e-7


def _loss_kernel(thresh_ref, invlen_ref, out_ref, lab_ref, part_ref):
    """One grid step over a block of `nb` samples flattened to (nb, T=S*C).

    thresh_ref : (nb, 1) int32   = length[i] * C   (valid flat elements / row)
    invlen_ref : (nb, 1) float32 = 1 / length[i]   (0 for padded rows)
    out_ref    : (nb, T) native dtype (probabilities)
    lab_ref    : (nb, T) native dtype (one-hot labels)
    part_ref   : (1, 1, 1) float32 partial   sum_i loss_i   for this block
    """
    nb, T = out_ref.shape

    # Whole-row masking on the flattened layout: one broadcasted compare.
    col = lax.broadcasted_iota(jnp.int32, (nb, T), 1)
    mask = col < thresh_ref[...]                      # (nb,1) broadcast vs (nb,T)

    # Upcast in-register; log/mul/accumulate stay in f32.
    x = out_ref[...].astype(jnp.float32)
    y = lab_ref[...].astype(jnp.float32)
    term = jnp.where(mask, y * jnp.log(x + DELTA), 0.0)

    row_sum = jnp.sum(term, axis=1, keepdims=True)    # (nb, 1) per-sample sum
    part = jnp.sum(row_sum * invlen_ref[...])         # scalar partial for block
    part_ref[...] = part.reshape(1, 1, 1)


def loss_fn(output, label, length_sen, num_sample, batch_size, *,
            block_samples=None, target_tile_bytes=4 * 1024 * 1024):
    N, S, C = output.shape
    assert num_sample == N
    T = S * C

    # Flatten seq/class axes -> lane-dense rows (free layout change).
    out2 = output.reshape(N, T)
    lab2 = label.reshape(N, T)

    # Choose how many samples per grid step (~target_tile_bytes per input tile).
    itemsize = jnp.dtype(output.dtype).itemsize
    if block_samples is None:
        nb = max(1, int(target_tile_bytes // max(T * itemsize, 1)))
    else:
        nb = int(block_samples)
    if nb >= N:
        nb = N
    else:
        nb = max(8, (nb // 8) * 8)      # sublane (8) rule when block < full dim
        if nb >= N:
            nb = N
    n_pad = ((N + nb - 1) // nb) * nb
    G = n_pad // nb

    # Per-sample scalars precomputed once (tiny arrays, plain JAX).
    lens = length_sen.astype(jnp.int32)
    thresh = (lens * C).reshape(N, 1).astype(jnp.int32)
    # TODO(synk): length_sen[i] == 0 divides by zero in the PyTorch reference;
    # clamp here so the kernel stays finite (such a row contributes 0).
    inv_len = (1.0 / jnp.maximum(lens, 1).astype(jnp.float32)).reshape(N, 1)
    # Note: length_sen[i] > S behaves like length == S for the sum but still
    # divides by length_sen[i] (mirrors how a clamped slice would behave).

    if n_pad != N:
        pad = n_pad - N
        out2 = jnp.pad(out2, ((0, pad), (0, 0)))
        lab2 = jnp.pad(lab2, ((0, pad), (0, 0)))
        thresh = jnp.pad(thresh, ((0, pad), (0, 0)))     # 0 -> fully masked
        inv_len = jnp.pad(inv_len, ((0, pad), (0, 0)))   # 0 -> contributes 0

    partials = pl.pallas_call(
        _loss_kernel,
        out_shape=jax.ShapeDtypeStruct((G, 1, 1), jnp.float32),
        grid_spec=pltpu.PrefetchScalarGridSpec(
            num_scalar_prefetch=0,
            grid=(G,),
            in_specs=[
                pl.BlockSpec((nb, 1), lambda i: (i, 0)),   # thresh (int32)
                pl.BlockSpec((nb, 1), lambda i: (i, 0)),   # 1/length (f32)
                pl.BlockSpec((nb, T), lambda i: (i, 0)),   # output, native dtype
                pl.BlockSpec((nb, T), lambda i: (i, 0)),   # label, native dtype
            ],
            out_specs=pl.BlockSpec((1, 1, 1), lambda i: (i, 0, 0)),
        ),
        compiler_params=pltpu.CompilerParams(
            dimension_semantics=("parallel",),             # megacore on v7x
            vmem_limit_bytes=48 * 1024 * 1024,             # headroom on v7x 64 MiB
        ),
    )(thresh, inv_len, out2, lab2)

    # Tiny epilogue on G scalars in plain JAX.
    return -jnp.sum(partials) / jnp.float32(batch_size)


if __name__ == "__main__":
    key = jax.random.PRNGKey(0)

    def reference(output, label, length_sen, batch_size):
        ref = 0.0
        for i in range(output.shape[0]):
            L = int(length_sen[i])
            ref -= float(jnp.sum(label[i, :L, :] *
                                 jnp.log(output[i, :L, :] + DELTA))) / L
        return ref / batch_size

    # --- Test 1: single-block path (original toy shapes) -------------------
    N, S, C = 4, 16, 8
    batch_size = 4
    k1, k2, k3, k4 = jax.random.split(key, 4)
    output = jax.random.uniform(k1, (N, S, C), jnp.float32,
                                minval=0.05, maxval=1.0)
    cls = jax.random.randint(k2, (N, S), 0, C)
    label = jax.nn.one_hot(cls, C, dtype=jnp.float32)
    length_sen = jnp.array([3, 16, 7, 11], dtype=jnp.int32)

    res = jax.block_until_ready(loss_fn(output, label, length_sen, N, batch_size))
    ref = reference(output, label, length_sen, batch_size)
    assert abs(float(res) - ref) < 1e-4, (float(res), ref)

    # --- Test 2: multi-block path with sample padding (N % nb != 0) --------
    N2, S2, C2 = 20, 16, 8
    bs2 = 20
    output2 = jax.random.uniform(k3, (N2, S2, C2), jnp.float32,
                                 minval=0.05, maxval=1.0)
    cls2 = jax.random.randint(k4, (N2, S2), 0, C2)
    label2 = jax.nn.one_hot(cls2, C2, dtype=jnp.float32)
    lens2 = jax.random.randint(jax.random.PRNGKey(7), (N2,), 1, S2 + 1).astype(jnp.int32)

    res2 = jax.block_until_ready(
        loss_fn(output2, label2, lens2, N2, bs2, block_samples=8))
    ref2 = reference(output2, label2, lens2, bs2)
    assert abs(float(res2) - ref2) < 1e-4, (float(res2), ref2)

    print("KERNEL_OK")
</pallas_src>

<mosaic_0001>
module attributes {stable_mosaic.version = 11 : i64} {
  func.func @_loss_kernel(%arg0: i32, %arg1: memref<4x1xi32, #tpu.memory_space<vmem>>, %arg2: memref<4x1xf32, #tpu.memory_space<vmem>>, %arg3: memref<4x128xf32, #tpu.memory_space<vmem>>, %arg4: memref<4x128xf32, #tpu.memory_space<vmem>>, %arg5: memref<1x1x1xf32, #tpu.memory_space<vmem>>) attributes {dimension_semantics = [#tpu.dimension_semantics<parallel>], iteration_bounds = array<i64: 1>, scalar_prefetch = 0 : i64, scratch_operands = 0 : i64, tpu.core_type = #tpu.core_type<tc>, window_params = [{transform_indices = @transform_0, window_bounds = array<i64: 4, 1>}, {transform_indices = @transform_1, window_bounds = array<i64: 4, 1>}, {transform_indices = @transform_2, window_bounds = array<i64: 4, 128>}, {transform_indices = @transform_3, window_bounds = array<i64: 4, 128>}, {transform_indices = @transform_4, window_bounds = array<i64: 1, 1, 1>}]} {
    %0 = tpu.iota {dimensions = array<i32: 1>} : vector<4x128xi32>
    %c0 = arith.constant 0 : index
    %c0_0 = arith.constant 0 : index
    %1 = vector.load %arg1[%c0, %c0_0] : memref<4x1xi32, #tpu.memory_space<vmem>>, vector<4x1xi32>
    %2 = vector.broadcast %1 : vector<4x1xi32> to vector<4x128xi32>
    %3 = arith.cmpi slt, %0, %2 : vector<4x128xi32>
    %c0_1 = arith.constant 0 : index
    %c0_2 = arith.constant 0 : index
    %4 = vector.load %arg3[%c0_1, %c0_2] : memref<4x128xf32, #tpu.memory_space<vmem>>, vector<4x128xf32>
    %c0_3 = arith.constant 0 : index
    %c0_4 = arith.constant 0 : index
    %5 = vector.load %arg4[%c0_3, %c0_4] : memref<4x128xf32, #tpu.memory_space<vmem>>, vector<4x128xf32>
    %cst = arith.constant 1.000000e-07 : f32
    %6 = vector.broadcast %cst : f32 to vector<4x128xf32>
    %7 = arith.addf %4, %6 : vector<4x128xf32>
    %8 = math.log %7 : vector<4x128xf32>
    %9 = arith.mulf %5, %8 : vector<4x128xf32>
    %cst_5 = arith.constant 0.000000e+00 : f32
    %10 = vector.broadcast %cst_5 : f32 to vector<4x128xf32>
    %11 = arith.select %3, %9, %10 : vector<4x128xi1>, vector<4x128xf32>
    %cst_6 = arith.constant dense<0.000000e+00> : vector<4xf32>
    %12 = vector.multi_reduction <add>, %11, %cst_6 [1] : vector<4x128xf32> to vector<4xf32>
    %13 = vector.shape_cast %12 : vector<4xf32> to vector<4x1xf32>
    %c0_7 = arith.constant 0 : index
    %c0_8 = arith.constant 0 : index
    %14 = vector.load %arg2[%c0_7, %c0_8] : memref<4x1xf32, #tpu.memory_space<vmem>>, vector<4x1xf32>
    %15 = arith.mulf %13, %14 : vector<4x1xf32>
    %16 = vector.shape_cast %15 : vector<4x1xf32> to vector<1x4x1xf32>
    %cst_9 = arith.constant dense<0.000000e+00> : vector<1xf32>
    %17 = vector.multi_reduction <add>, %16, %cst_9 [1, 2] : vector<1x4x1xf32> to vector<1xf32>
    %18 = vector.shape_cast %17 : vector<1xf32> to vector<1x1x1xf32>
    %19 = vector.extract %18[0, 0, 0] : f32 from vector<1x1x1xf32>
    %20 = vector.broadcast %19 : f32 to vector<1x1x1xf32>
    %c0_10 = arith.constant 0 : index
    %c0_11 = arith.constant 0 : index
    %c0_12 = arith.constant 0 : index
    %21 = vector.load %arg5[%c0_10, %c0_11, %c0_12] : memref<1x1x1xf32, #tpu.memory_space<vmem>>, vector<1x1x1xf32>
    tpu.vector_store %arg5[%c0_10, %c0_11, %c0_12], %20 {strides = array<i32>} : memref<1x1x1xf32, #tpu.memory_space<vmem>>, vector<1x1x1xf32>,
    return
  }
  func.func @transform_0(%arg0: i32) -> (i32, i32) {
    %c0_i32 = arith.constant 0 : i32
    %c0_i32_0 = arith.constant 0 : i32
    return %arg0, %c0_i32 : i32, i32
  }
  func.func @transform_1(%arg0: i32) -> (i32, i32) {
    %c0_i32 = arith.constant 0 : i32
    %c0_i32_0 = arith.constant 0 : i32
    return %arg0, %c0_i32 : i32, i32
  }
  func.func @transform_2(%arg0: i32) -> (i32, i32) {
    %c0_i32 = arith.constant 0 : i32
    %c0_i32_0 = arith.constant 0 : i32
    return %arg0, %c0_i32 : i32, i32
  }
  func.func @transform_3(%arg0: i32) -> (i32, i32) {
    %c0_i32 = arith.constant 0 : i32
    %c0_i32_0 = arith.constant 0 : i32
    return %arg0, %c0_i32 : i32, i32
  }
  func.func @transform_4(%arg0: i32) -> (i32, i32, i32) {
    %c0_i32 = arith.constant 0 : i32
    %c0_i32_0 = arith.constant 0 : i32
    %c0_i32_1 = arith.constant 0 : i32
    return %arg0, %c0_i32, %c0_i32_0 : i32, i32, i32
  }
}

</mosaic_0001>

<llo_original>
// kernel: tpu_custom_call.1
$region0: #{tpu_custom_call.1}
  #allocation0 [shape = 'u32[]', space=smem, size = 0x4, offset = 0x4, fixed_abs, tag = 'smem constant byte address 0x4 - core index']
  #allocation1 [shape = 'u32[144,128]{1,0:T(1,128)}', space=vmem, size = 0x12000, scoped, tag = 'internal scratch']
  %s0 = inlined_call_operand.vmem [shape: s32[4,1], index: 0, kind: input, shape index: {}]
  %s1 = inlined_call_operand.vmem [shape: f32[4,1], index: 1, kind: input, shape index: {}]
  %s2 = inlined_call_operand.vmem [shape: f32[4,128], index: 2, kind: input, shape index: {}]
  %s3 = inlined_call_operand.vmem [shape: f32[4,128], index: 3, kind: input, shape index: {}]
  %s4 = inlined_call_operand.hbm [shape: f32[1,1,1], index: 4, kind: output, shape index: {}]
  %s5 = sld [smem:[#allocation0]]
  $region26: #{tpu_custom_call.1} parent=0
    _
  %s7 = ssub.s32 1, %s5
  %s8 = scalar_select 0, %s7, %s5
  $region1: #{tpu_custom_call.1} parent=0
    #allocation2 [shape = 'u8[512]{0}', space=vmem, size = 0x400, scoped, tag = 'output window, operand 0, single buffered']
    #allocation3 [shape = 's32[1]{0}', space=sflag, size = 0x4, scoped, tag = 'scoped memory for tpu_custom_call.1']
    %9 = vsyncpa [#allocation3], 0
    // Predicated region
    $region2: #{tpu_custom_call.1} parent=1 // pred_check
      _
    $region3: #{tpu_custom_call.1} parent=1 // pred_check_branch
      %11 = sbr.rel (0) target = $region5
    $region4: #{tpu_custom_call.1} parent=1 // pred_region
      _
    $region5: #{tpu_custom_call.1} parent=1 // pred_fallthru
      _
    // Predicated region
    $region6: #{tpu_custom_call.1} parent=1 // pred_check
      _
    $region7: #{tpu_custom_call.1} parent=1 // pred_check_branch
      %13 = sbr.rel (0) target = $region9
    $region8: #{tpu_custom_call.1} parent=1 // pred_region
      _
    $region9: #{tpu_custom_call.1} parent=1 // pred_fallthru
      _
    // Predicated region
    $region10: #{tpu_custom_call.1} parent=1 // pred_check
      _
    $region11: #{tpu_custom_call.1} parent=1 // pred_check_branch
      %15 = sbr.rel (0) target = $region13
    $region12: #{tpu_custom_call.1} parent=1 // pred_region
      _
    $region13: #{tpu_custom_call.1} parent=1 // pred_fallthru
      _
    // Predicated region
    $region14: #{tpu_custom_call.1} parent=1 // pred_check
      _
    $region15: #{tpu_custom_call.1} parent=1 // pred_check_branch
      %17 = sbr.rel (0) target = $region17
    $region16: #{tpu_custom_call.1} parent=1 // pred_region
      _
    $region17: #{tpu_custom_call.1} parent=1 // pred_fallthru
      _
    %v18 = vlaneseq
    %v19 = vand.u32 %v18, 127
    %v20 = vld [vmem:[%s0] sm:$0xf]
    %21 = vset.pattern.permute.xlu0 0
    %22 = vperm.xlu0 %21, %v20
    %v23 = vpop.permute.xlu0 %22
    %vm24 = vcmp.lt.s32.totalorder %v19, %v23
    %v25 = vld [vmem:[%s2] sm:$0xf]
    %v26 = vld [vmem:[%s3] sm:$0xf]
    %v27 = vadd.f32 %v25, 1e-07
    %v28 = vlog2.pop %v27
    %v29 = vmul.f32 %v28, 0.6931472
    %v30 = vmul.f32 %v26, %v29
    %v31 = vsel %vm24, %v30, 0.0
    %vm32 = vcmask 1043456
    %v33 = vsel %vm32, %v31, 0.0
    %34 = vadd.xlane.f32.xlu0 %v33
    %v35 = vpop.xlane.xlu0 %34
    %v36 = vld [vmem:[%s1] sm:$0xf]
    %v37 = vmul.f32 %v35, %v36
    %vm38 = vcmask 3072
    %v39 = vsel %vm38, %v37, 0.0
    %40 = vadd.xlane.f32.xlu0 %v39
    %v41 = vpop.xlane.xlu0 %40
    %v42 = vrot.slane %v41, 4
    %v43 = vadd.f32 %v41, %v42
    %v44 = vrot.slane %v43, 2
    %v45 = vadd.f32 %v43, %v44
    %v46 = vrot.slane %v45, 1
    %v47 = vadd.f32 %v45, %v46
    %s48 = vtos %v47
    %v49 = vstv %s48
    %vm50 = vcmask 0
    %51 = vst.msk [vmem:[#allocation2] sm:$0x1] %vm50, %v49
    // Predicated region
    $region18: #{tpu_custom_call.1} parent=1 // pred_check
      _
    $region19: #{tpu_custom_call.1} parent=1 // pred_check_branch
      %53 = sbr.rel (0) target = $region21
    $region20: #{tpu_custom_call.1} parent=1 // pred_region
      %s55 = ssub.s32 16, 16
      %56 = vsyncadd [#allocation3], %s55
      %s58 = sshll.u32 [#allocation2], 4
      %s59 = int_to_ptr.vmem [resolvable:$true] %s58
      %61 = dma.vmem_to_hbm [thread:$0]  %s59, 16, %s4, [#allocation3]
    $region21: #{tpu_custom_call.1} parent=1 // pred_fallthru
      _
    // Predicated region
    $region22: #{tpu_custom_call.1} parent=1 // pred_check
      _
    $region23: #{tpu_custom_call.1} parent=1 // pred_check_branch
      %63 = sbr.rel (0) target = $region25
    $region24: #{tpu_custom_call.1} parent=1 // pred_region
      %64 = dma.done [#allocation3], 16
    $region25: #{tpu_custom_call.1} parent=1 // pred_fallthru
      _
    %65 = vsyncpa [#allocation3], 1

</llo_original>
